<compile_context>
chip_gen: v6e
topology: v6e:2x2x1
jax: 0.10.0
libtpu: 0.0.40
codegen_flags: <defaults>
</compile_context>

<pallas_src>
import functools

import jax
import jax.numpy as jnp
from jax.experimental import pallas as pl
from jax.experimental.pallas import tpu as pltpu


def _density_loss_kernel(pred_ref, target_ref, out_ref, *, tb, nc):
    # pred_ref / target_ref: (TB, HW) block of the flattened (NC, H*W) inputs.
    i = pl.program_id(0)

    # Row-validity mask for the (possibly partial) last block: global rows
    # >= nc are garbage (no wrapper-side padding) and must contribute 0.
    row_ids = jax.lax.broadcasted_iota(jnp.int32, (tb, 1), 0) + i * tb
    row_mask = row_ids < nc                                   # (TB, 1)

    p = pred_ref[...].astype(jnp.float32)
    t = target_ref[...].astype(jnp.float32)
    diff = jnp.where(row_mask, p - t, 0.0)                    # masked diff

    # Block-partial sum of squared errors (numerator of the global MSE).
    sse_p = jnp.sum(diff * diff)

    # Per-(n, c)-row MAPE contribution.
    # pred_count - target_count == sum(diff); only sum(t) and sum(diff)
    # lane-reductions are needed.  Garbage rows are masked out per-row (the
    # select discards any inf/nan produced by the garbage divide).
    row_t = jnp.sum(t, axis=-1, keepdims=True)                # (TB, 1)
    row_d = jnp.sum(diff, axis=-1, keepdims=True)             # (TB, 1)
    mape_rows = jnp.where(row_mask, jnp.abs(row_d) / (row_t + 1.0), 0.0)
    mape_p = jnp.sum(mape_rows)

    # Pack the two block-partial scalars into a lane-dense (8, 128) tile:
    #   [0, 0] -> SSE partial, [1, 0] -> MAPE partial, everything else 0.
    rows = jax.lax.broadcasted_iota(jnp.int32, (8, 128), 0)
    cols = jax.lax.broadcasted_iota(jnp.int32, (8, 128), 1)
    tile = jnp.where((rows == 0) & (cols == 0), sse_p,
                     jnp.where((rows == 1) & (cols == 0), mape_p, 0.0))
    out_ref[...] = tile.reshape(1, 8, 128)


def density_loss(pred, target, lambda_mse=1.0, lambda_mape=0.5):
    assert pred.shape == target.shape
    n, c, h, w = pred.shape
    nc = n * c
    hw = h * w

    pred_r = pred.reshape(nc, hw)
    target_r = target.reshape(nc, hw)

    # Size TB against the true per-step VMEM footprint:
    #   inputs:   2 arrays x 2 pipeline buffers x TB*HW*itemsize
    #   kernel:   ~3 full-tile f32 temporaries (p, t, masked diff)
    itemsize = jnp.dtype(pred_r.dtype).itemsize
    bytes_per_row = hw * (4 * itemsize + 3 * 4)
    vmem_compute_budget = 40 * 1024 * 1024
    tb = max(8, (vmem_compute_budget // bytes_per_row) // 8 * 8)
    # Never bigger than the row-padded NC.
    tb = min(tb, pl.cdiv(nc, 8) * 8)
    # v7x dual-TC: guarantee >= 2 blocks so the "parallel" axis shards across
    # both TensorCores (no-op on single-TC v5e/v6e).
    if nc > 8:
        tb = min(tb, pl.cdiv(pl.cdiv(nc, 2), 8) * 8)

    num_blocks = pl.cdiv(nc, tb)

    kernel = functools.partial(_density_loss_kernel, tb=tb, nc=nc)

    cost = pl.CostEstimate(
        flops=3 * nc * hw,
        transcendentals=0,
        bytes_accessed=2 * nc * hw * itemsize + num_blocks * 8 * 128 * 4,
    )

    partials = pl.pallas_call(
        kernel,
        out_shape=jax.ShapeDtypeStruct((num_blocks, 8, 128), jnp.float32),
        grid_spec=pltpu.PrefetchScalarGridSpec(
            num_scalar_prefetch=0,
            grid=(num_blocks,),
            in_specs=[
                pl.BlockSpec((tb, hw), lambda i: (i, 0)),
                pl.BlockSpec((tb, hw), lambda i: (i, 0)),
            ],
            out_specs=pl.BlockSpec((1, 8, 128), lambda i: (i, 0, 0)),
        ),
        compiler_params=pltpu.CompilerParams(
            # Blocks are fully independent -> parallel grid (dual-TC on v7x).
            dimension_semantics=("parallel",),
            vmem_limit_bytes=48 * 1024 * 1024,
        ),
        cost_estimate=cost,
    )(pred_r, target_r)

    # Tiny final reduction over the per-block partials in JAX (exact: every
    # other position of each tile is 0).
    sse_total = jnp.sum(partials[:, 0, :])
    mape_total = jnp.sum(partials[:, 1, :])

    mse = sse_total / float(nc * h * w)
    mape = mape_total / float(nc)
    return lambda_mse * mse + lambda_mape * mape


def _reference_density_loss(pred, target, lambda_mse=1.0, lambda_mape=0.5):
    pred = pred.astype(jnp.float32)
    target = target.astype(jnp.float32)
    mse_loss = jnp.mean((pred - target) ** 2)
    pred_count = pred.sum(axis=(2, 3)) + 1.0
    target_count = target.sum(axis=(2, 3)) + 1.0
    mape_loss = jnp.mean(jnp.abs(target_count - pred_count) / target_count)
    return lambda_mse * mse_loss + lambda_mape * mape_loss


if __name__ == "__main__":
    key = jax.random.PRNGKey(0)

    # Case 1: NCHW like the PyTorch module's density-map pred/target (NC = 8,
    # single block).
    k1, k2, k3, k4 = jax.random.split(key, 4)
    B, C, H, W = 2, 4, 16, 16
    pred = jax.nn.relu(jax.random.normal(k1, (B, C, H, W), dtype=jnp.float32))
    target = jax.nn.relu(jax.random.normal(k2, (B, C, H, W), dtype=jnp.float32))

    loss = jax.block_until_ready(density_loss(pred, target, 1.0, 0.5))
    ref = _reference_density_loss(pred, target, 1.0, 0.5)
    assert jnp.allclose(loss, ref, rtol=1e-5, atol=1e-5), (loss, ref)

    # Case 2: NC = 15 (not a multiple of the 8-row block) exercises the
    # in-kernel row-masking path and the multi-block grid.
    B2, C2 = 3, 5
    pred2 = jax.nn.relu(jax.random.normal(k3, (B2, C2, H, W), dtype=jnp.float32))
    target2 = jax.nn.relu(jax.random.normal(k4, (B2, C2, H, W), dtype=jnp.float32))

    loss2 = jax.block_until_ready(density_loss(pred2, target2, 1.0, 0.5))
    ref2 = _reference_density_loss(pred2, target2, 1.0, 0.5)
    assert jnp.allclose(loss2, ref2, rtol=1e-5, atol=1e-5), (loss2, ref2)

    print("KERNEL_OK")
</pallas_src>

<mosaic_0001>
module attributes {stable_mosaic.version = 11 : i64} {
  func.func @_density_loss_kernel(%arg0: i32, %arg1: memref<8x256xf32, #tpu.memory_space<vmem>>, %arg2: memref<8x256xf32, #tpu.memory_space<vmem>>, %arg3: memref<1x8x128xf32, #tpu.memory_space<vmem>>) attributes {dimension_semantics = [#tpu.dimension_semantics<parallel>], iteration_bounds = array<i64: 1>, scalar_prefetch = 0 : i64, scratch_operands = 0 : i64, tpu.core_type = #tpu.core_type<tc>, window_params = [{transform_indices = @transform_0, window_bounds = array<i64: 8, 256>}, {transform_indices = @transform_1, window_bounds = array<i64: 8, 256>}, {transform_indices = @transform_2, window_bounds = array<i64: 1, 8, 128>}]} {
    %0 = tpu.iota {dimensions = array<i32: 0>} : vector<8x1xi32>
    %c8_i32 = arith.constant 8 : i32
    %1 = arith.muli %arg0, %c8_i32 : i32
    %2 = vector.broadcast %1 : i32 to vector<8x1xi32>
    %3 = arith.addi %0, %2 : vector<8x1xi32>
    %c8_i32_0 = arith.constant 8 : i32
    %4 = vector.broadcast %c8_i32_0 : i32 to vector<8x1xi32>
    %5 = arith.cmpi slt, %3, %4 : vector<8x1xi32>
    %c0 = arith.constant 0 : index
    %c0_1 = arith.constant 0 : index
    %6 = vector.load %arg1[%c0, %c0_1] : memref<8x256xf32, #tpu.memory_space<vmem>>, vector<8x256xf32>
    %c0_2 = arith.constant 0 : index
    %c0_3 = arith.constant 0 : index
    %7 = vector.load %arg2[%c0_2, %c0_3] : memref<8x256xf32, #tpu.memory_space<vmem>>, vector<8x256xf32>
    %8 = arith.subf %6, %7 : vector<8x256xf32>
    %cst = arith.constant 0.000000e+00 : f32
    %9 = vector.shape_cast %5 : vector<8x1xi1> to vector<8x1xi1>
    %10 = vector.broadcast %9 : vector<8x1xi1> to vector<8x256xi1>
    %11 = vector.broadcast %cst : f32 to vector<8x256xf32>
    %12 = arith.select %10, %8, %11 : vector<8x256xi1>, vector<8x256xf32>
    %13 = arith.mulf %12, %12 : vector<8x256xf32>
    %14 = vector.shape_cast %13 : vector<8x256xf32> to vector<1x8x256xf32>
    %cst_4 = arith.constant dense<0.000000e+00> : vector<1xf32>
    %15 = vector.multi_reduction <add>, %14, %cst_4 [1, 2] : vector<1x8x256xf32> to vector<1xf32>
    %16 = vector.shape_cast %15 : vector<1xf32> to vector<1x1x1xf32>
    %17 = vector.extract %16[0, 0, 0] : f32 from vector<1x1x1xf32>
    %cst_5 = arith.constant dense<0.000000e+00> : vector<8xf32>
    %18 = vector.multi_reduction <add>, %7, %cst_5 [1] : vector<8x256xf32> to vector<8xf32>
    %19 = vector.shape_cast %18 : vector<8xf32> to vector<8x1xf32>
    %cst_6 = arith.constant dense<0.000000e+00> : vector<8xf32>
    %20 = vector.multi_reduction <add>, %12, %cst_6 [1] : vector<8x256xf32> to vector<8xf32>
    %21 = vector.shape_cast %20 : vector<8xf32> to vector<8x1xf32>
    %22 = math.absf %21 : vector<8x1xf32>
    %cst_7 = arith.constant 1.000000e+00 : f32
    %23 = vector.broadcast %cst_7 : f32 to vector<8x1xf32>
    %24 = arith.addf %19, %23 : vector<8x1xf32>
    %25 = arith.divf %22, %24 : vector<8x1xf32>
    %cst_8 = arith.constant 0.000000e+00 : f32
    %26 = vector.broadcast %cst_8 : f32 to vector<8x1xf32>
    %27 = arith.select %5, %25, %26 : vector<8x1xi1>, vector<8x1xf32>
    %28 = vector.shape_cast %27 : vector<8x1xf32> to vector<1x8x1xf32>
    %cst_9 = arith.constant dense<0.000000e+00> : vector<1xf32>
    %29 = vector.multi_reduction <add>, %28, %cst_9 [1, 2] : vector<1x8x1xf32> to vector<1xf32>
    %30 = vector.shape_cast %29 : vector<1xf32> to vector<1x1x1xf32>
    %31 = vector.extract %30[0, 0, 0] : f32 from vector<1x1x1xf32>
    %32 = tpu.iota {dimensions = array<i32: 0>} : vector<8x128xi32>
    %33 = tpu.iota {dimensions = array<i32: 1>} : vector<8x128xi32>
    %c0_i32 = arith.constant 0 : i32
    %34 = vector.broadcast %c0_i32 : i32 to vector<8x128xi32>
    %35 = arith.cmpi eq, %32, %34 : vector<8x128xi32>
    %c0_i32_10 = arith.constant 0 : i32
    %36 = vector.broadcast %c0_i32_10 : i32 to vector<8x128xi32>
    %37 = arith.cmpi eq, %33, %36 : vector<8x128xi32>
    %38 = arith.andi %35, %37 : vector<8x128xi1>
    %c1_i32 = arith.constant 1 : i32
    %39 = vector.broadcast %c1_i32 : i32 to vector<8x128xi32>
    %40 = arith.cmpi eq, %32, %39 : vector<8x128xi32>
    %c0_i32_11 = arith.constant 0 : i32
    %41 = vector.broadcast %c0_i32_11 : i32 to vector<8x128xi32>
    %42 = arith.cmpi eq, %33, %41 : vector<8x128xi32>
    %43 = arith.andi %40, %42 : vector<8x128xi1>
    %cst_12 = arith.constant 0.000000e+00 : f32
    %44 = vector.broadcast %31 : f32 to vector<8x128xf32>
    %45 = vector.broadcast %cst_12 : f32 to vector<8x128xf32>
    %46 = arith.select %43, %44, %45 : vector<8x128xi1>, vector<8x128xf32>
    %47 = vector.broadcast %17 : f32 to vector<8x128xf32>
    %48 = arith.select %38, %47, %46 : vector<8x128xi1>, vector<8x128xf32>
    %49 = vector.shape_cast %48 : vector<8x128xf32> to vector<1x8x128xf32>
    %c0_13 = arith.constant 0 : index
    %c0_14 = arith.constant 0 : index
    %c0_15 = arith.constant 0 : index
    %50 = vector.load %arg3[%c0_13, %c0_14, %c0_15] : memref<1x8x128xf32, #tpu.memory_space<vmem>>, vector<1x8x128xf32>
    tpu.vector_store %arg3[%c0_13, %c0_14, %c0_15], %49 {strides = array<i32>} : memref<1x8x128xf32, #tpu.memory_space<vmem>>, vector<1x8x128xf32>,
    return
  }
  func.func @transform_0(%arg0: i32) -> (i32, i32) {
    %c0_i32 = arith.constant 0 : i32
    %c0_i32_0 = arith.constant 0 : i32
    return %arg0, %c0_i32 : i32, i32
  }
  func.func @transform_1(%arg0: i32) -> (i32, i32) {
    %c0_i32 = arith.constant 0 : i32
    %c0_i32_0 = arith.constant 0 : i32
    return %arg0, %c0_i32 : i32, i32
  }
  func.func @transform_2(%arg0: i32) -> (i32, i32, i32) {
    %c0_i32 = arith.constant 0 : i32
    %c0_i32_0 = arith.constant 0 : i32
    %c0_i32_1 = arith.constant 0 : i32
    return %arg0, %c0_i32, %c0_i32_0 : i32, i32, i32
  }
}

</mosaic_0001>

<llo_original>
// kernel: tpu_custom_call.1
$region0: #{tpu_custom_call.1}
  #allocation0 [shape = 'u32[]', space=smem, size = 0x4, offset = 0x4, fixed_abs, tag = 'smem constant byte address 0x4 - core index']
  #allocation1 [shape = 'u32[144,128]{1,0:T(1,128)}', space=vmem, size = 0x12000, scoped, tag = 'internal scratch']
  %s0 = inlined_call_operand.hbm [shape: f32[8,256], index: 0, kind: input, shape index: {}]
  %s1 = inlined_call_operand.hbm [shape: f32[8,256], index: 1, kind: input, shape index: {}]
  %s2 = inlined_call_operand.hbm [shape: f32[1,8,128], index: 2, kind: output, shape index: {}]
  %s3 = sld [smem:[#allocation0]]
  $region26: #{tpu_custom_call.1} parent=0
    _
  %s5 = ssub.s32 1, %s3
  %s6 = scalar_select 0, %s5, %s3
  $region1: #{tpu_custom_call.1} parent=0
    #allocation2 [shape = 'u8[8192]{0}', space=vmem, size = 0x2000, scoped, tag = 'input window, operand 0, single buffered']
    #allocation3 [shape = 's32[1]{0}', space=sflag, size = 0x4, scoped, tag = 'scoped memory for tpu_custom_call.1']
    #allocation4 [shape = 's32[1]{0}', space=sflag, size = 0x4, scoped, tag = 'scoped memory for tpu_custom_call.1']
    #allocation5 [shape = 'u8[8192]{0}', space=vmem, size = 0x2000, scoped, tag = 'input window, operand 1, single buffered']
    #allocation6 [shape = 's32[1]{0}', space=sflag, size = 0x4, scoped, tag = 'scoped memory for tpu_custom_call.1']
    #allocation7 [shape = 'u8[4096]{0}', space=vmem, size = 0x1000, scoped, tag = 'output window, operand 0, single buffered']
    %7 = vsyncpa [#allocation3], 0
    %8 = vsyncpa [#allocation6], 0
    %9 = vsyncpa [#allocation4], 0
    // Predicated region
    $region2: #{tpu_custom_call.1} parent=1 // pred_check
      _
    $region3: #{tpu_custom_call.1} parent=1 // pred_check_branch
      %11 = sbr.rel (0) target = $region5
    $region4: #{tpu_custom_call.1} parent=1 // pred_region
      %s13 = ssub.s32 256, 256
      %14 = vsyncadd [#allocation3], %s13
      %s16 = sshll.u32 [#allocation2], 4
      %s17 = int_to_ptr.vmem [resolvable:$true] %s16
      %19 = dma.hbm_to_vmem [thread:$0]  %s0, 256, %s17, [#allocation3]
    $region5: #{tpu_custom_call.1} parent=1 // pred_fallthru
      _
    // Predicated region
    $region6: #{tpu_custom_call.1} parent=1 // pred_check
      _
    $region7: #{tpu_custom_call.1} parent=1 // pred_check_branch
      %21 = sbr.rel (0) target = $region9
    $region8: #{tpu_custom_call.1} parent=1 // pred_region
      %s23 = ssub.s32 256, 256
      %24 = vsyncadd [#allocation6], %s23
      %s26 = sshll.u32 [#allocation5], 4
      %s27 = int_to_ptr.vmem [resolvable:$true] %s26
      %29 = dma.hbm_to_vmem [thread:$0]  %s1, 256, %s27, [#allocation6]
    $region9: #{tpu_custom_call.1} parent=1 // pred_fallthru
      _
    // Predicated region
    $region10: #{tpu_custom_call.1} parent=1 // pred_check
      _
    $region11: #{tpu_custom_call.1} parent=1 // pred_check_branch
      %31 = sbr.rel (0) target = $region13
    $region12: #{tpu_custom_call.1} parent=1 // pred_region
      %32 = dma.done [#allocation3], 256
    $region13: #{tpu_custom_call.1} parent=1 // pred_fallthru
      _
    // Predicated region
    $region14: #{tpu_custom_call.1} parent=1 // pred_check
      _
    $region15: #{tpu_custom_call.1} parent=1 // pred_check_branch
      %34 = sbr.rel (0) target = $region17
    $region16: #{tpu_custom_call.1} parent=1 // pred_region
      %35 = dma.done [#allocation6], 256
    $region17: #{tpu_custom_call.1} parent=1 // pred_fallthru
      _
    %v36 = vlaneseq
    %v37 = vshrl.u32 %v36, 7
    %s38 = smul.u32 0, 8
    %v39 = vstv %s38
    %v40 = vadd.s32 %v37, %v39
    %vm41 = vcmp.lt.s32.totalorder %v40, 8
    %v42 = vld [vmem:[#allocation2] sm:$0xff]
    %v43 = vld [vmem:[#allocation2 + $0x8] sm:$0xff]
    %v44 = vld [vmem:[#allocation5] sm:$0xff]
    %v45 = vld [vmem:[#allocation5 + $0x8] sm:$0xff]
    %v46 = vsub.f32 %v42, %v44
    %v47 = vsub.f32 %v43, %v45
    %v48 = vsel %vm41, 1, 0
    %vm49 = vcmp.eq.s32.totalorder %v48, 1
    %v50 = vsel %vm49, %v46, 0.0
    %v51 = vsel %vm49, %v47, 0.0
    %v52 = vmul.f32 %v50, %v50
    %v53 = vmul.f32 %v51, %v51
    %v54 = vadd.f32 %v52, %v53
    %55 = vadd.xlane.f32.xlu0 %v54
    %v56 = vpop.xlane.xlu0 %55
    %v57 = vrot.slane %v56, 4
    %v58 = vadd.f32 %v56, %v57
    %v59 = vrot.slane %v58, 2
    %v60 = vadd.f32 %v58, %v59
    %v61 = vrot.slane %v60, 1
    %v62 = vadd.f32 %v60, %v61
    %s63 = vtos %v62
    %v64 = vadd.f32 %v44, %v45
    %65 = vadd.xlane.f32.xlu0 %v64
    %v66 = vpop.xlane.xlu0 %65
    %v67 = vadd.f32 %v50, %v51
    %68 = vadd.xlane.f32.xlu0 %v67
    %v69 = vpop.xlane.xlu0 %68
    %v70 = vand.u32 2147483647, %v69
    %v71 = vadd.f32 %v66, 1.0
    %v72 = vrcp.pop %v71
    %v73 = vmul.f32 %v70, %v72
    %v74 = vsel %vm41, %v73, 0.0
    %vm75 = vcmask 7168
    %v76 = vsel %vm75, %v74, 0.0
    %77 = vadd.xlane.f32.xlu0 %v76
    %v78 = vpop.xlane.xlu0 %77
    %v79 = vrot.slane %v78, 4
    %v80 = vadd.f32 %v78, %v79
    %v81 = vrot.slane %v80, 2
    %v82 = vadd.f32 %v80, %v81
    %v83 = vrot.slane %v82, 1
    %v84 = vadd.f32 %v82, %v83
    %s85 = vtos %v84
    %v86 = vlaneseq
    %v87 = vand.u32 %v86, 127
    %vm88 = vcmp.eq.s32.totalorder %v37, 0
    %vm89 = vcmp.eq.s32.totalorder %v87, 0
    %vm90 = vmand %vm88, %vm89
    %vm91 = vcmp.eq.s32.totalorder %v37, 1
    %vm92 = vmand %vm91, %vm89
    %v93 = vstv %s85
    %v94 = vsel %vm92, %v93, 0.0
    %v95 = vstv %s63
    %v96 = vsel %vm90, %v95, %v94
    %97 = vst [vmem:[#allocation7] sm:$0xff] %v96
    // Predicated region
    $region18: #{tpu_custom_call.1} parent=1 // pred_check
      _
    $region19: #{tpu_custom_call.1} parent=1 // pred_check_branch
      %99 = sbr.rel (0) target = $region21
    $region20: #{tpu_custom_call.1} parent=1 // pred_region
      %s101 = ssub.s32 128, 128
      %102 = vsyncadd [#allocation4], %s101
      %s104 = sshll.u32 [#allocation7], 4
      %s105 = int_to_ptr.vmem [resolvable:$true] %s104
      %107 = dma.vmem_to_hbm [thread:$0]  %s105, 128, %s2, [#allocation4]
    $region21: #{tpu_custom_call.1} parent=1 // pred_fallthru
      _
    // Predicated region
    $region22: #{tpu_custom_call.1} parent=1 // pred_check
      _
    $region23: #{tpu_custom_call.1} parent=1 // pred_check_branch
      %109 = sbr.rel (0) target = $region25
    $region24: #{tpu_custom_call.1} parent=1 // pred_region
      %110 = dma.done [#allocation4], 128
    $region25: #{tpu_custom_call.1} parent=1 // pred_fallthru
      _
    %111 = vsyncpa [#allocation3], 1
    %112 = vsyncpa [#allocation6], 1
    %113 = vsyncpa [#allocation4], 1

</llo_original>
